<compile_context>
chip_gen: v6e
topology: v6e:2x2x1
jax: 0.10.0
libtpu: 0.0.40
codegen_flags: <defaults>
</compile_context>

<pallas_src>
import jax
import jax.numpy as jnp
from jax.experimental import pallas as pl
from jax.experimental.pallas import tpu as pltpu

IGNORE_INDEX = -100
# Used both as the class-padding value and the running-max init. Finite (not -inf)
# so no inf-inf NaN can appear; exp(_NEG_BIG - m) underflows to exactly 0 in f32.
_NEG_BIG = -1.0e30


def _round_up(x, m):
    return (x + m - 1) // m * m


def _pick_tiles():
    """Generation-aware (batch_tile, class_tile) sizes."""
    try:
        kind = jax.devices()[0].device_kind.lower()
    except Exception:
        kind = ""
    if "v5" in kind or "v6" in kind:
        return 256, 4096   # 128 MiB VMEM parts: larger class tile, fewer grid steps
    return 256, 2048       # v7x (64 MiB VMEM) / unknown: keep 2 bufs/input well under limit


def _logits_index_map(nct_h, nct):
    if nct_h == nct:
        return lambda i, k: (i, k)
    # heads with fewer class tiles clamp to their last tile (same block index ->
    # Pallas issues no new DMA for the extra grid steps; compute is pl.when-gated)
    return lambda i, k: (i, jnp.minimum(k, nct_h - 1))


def _make_fused_ce_kernel(head_ncts, nct, nbt):
    """Kernel over grid (nbt, nct) emitting per-head (sum of NLL, valid count)."""
    n_heads = len(head_ncts)

    def kernel(*refs):
        in_refs = refs[: 2 * n_heads]            # (logits_h, target_h) pairs
        out_ref = refs[2 * n_heads]              # SMEM (1, 2*n_heads): sum,count per head
        scratch = refs[2 * n_heads + 1:]         # 3 VMEM (Bt,1) f32 refs per head

        bi = pl.program_id(0)                    # batch-tile index
        ki = pl.program_id(1)                    # class-tile index (innermost)

        @pl.when(jnp.logical_and(bi == 0, ki == 0))
        def _init_out():
            for j in range(2 * n_heads):
                out_ref[0, j] = jnp.float32(0.0)

        for h in range(n_heads):
            logits_ref = in_refs[2 * h]
            tgt_ref = in_refs[2 * h + 1]
            m_ref = scratch[3 * h + 0]
            l_ref = scratch[3 * h + 1]
            t_ref = scratch[3 * h + 2]
            nct_h = head_ncts[h]

            # start of each class sweep: reset per-batch-tile accumulators
            @pl.when(ki == 0)
            def _init_head():
                m_ref[...] = jnp.full_like(m_ref, _NEG_BIG)
                l_ref[...] = jnp.zeros_like(l_ref)
                t_ref[...] = jnp.zeros_like(t_ref)

            def _update():
                tile = logits_ref[...].astype(jnp.float32)       # (Bt, Ct_h)
                tgt = tgt_ref[...]                               # (Bt, 1) int32
                bt, ct = tile.shape
                # single pass over the tile: online log-sum-exp + target-logit pick
                m_old = m_ref[...]
                m_new = jnp.maximum(m_old, jnp.max(tile, axis=-1, keepdims=True))
                l_ref[...] = l_ref[...] * jnp.exp(m_old - m_new) + jnp.sum(
                    jnp.exp(tile - m_new), axis=-1, keepdims=True)
                m_ref[...] = m_new
                col = jax.lax.broadcasted_iota(jnp.int32, (bt, ct), 1) + ki * ct
                t_ref[...] = t_ref[...] + jnp.sum(
                    jnp.where(col == tgt, tile, 0.0), axis=-1, keepdims=True)

            if nct_h == nct:
                _update()
            else:
                pl.when(ki < nct_h)(_update)

            # end of the class sweep: reduce this batch tile to scalars and accumulate
            @pl.when(ki == nct - 1)
            def _finalize_tile():
                valid = tgt_ref[...] != IGNORE_INDEX             # (Bt, 1)
                lse = m_ref[...] + jnp.log(l_ref[...])
                nll = jnp.where(valid, lse - t_ref[...], 0.0)
                out_ref[0, 2 * h] = out_ref[0, 2 * h] + jnp.sum(nll)
                out_ref[0, 2 * h + 1] = out_ref[0, 2 * h + 1] + jnp.sum(
                    valid.astype(jnp.float32))

    return kernel


def fused_cross_entropy_means(heads):
    """heads: list of (logits (B, C), target (B,)).

    Returns a list of mean cross-entropy losses (ignore_index=-100, mean over
    non-ignored rows; NaN if all rows of a head are ignored -- torch semantics).
    """
    n_heads = len(heads)
    B = int(heads[0][0].shape[0])
    bt_max, ct_max = _pick_tiles()

    Bt = min(_round_up(B, 8), bt_max)
    B_pad = _round_up(B, Bt)
    nbt = B_pad // Bt

    padded, cts, ncts = [], [], []
    for logits, target in heads:
        assert int(logits.shape[0]) == B
        C = int(logits.shape[1])
        C_pad = _round_up(C, 128)
        Ct = min(C_pad, ct_max)
        C_pad = _round_up(C_pad, Ct)
        nct_h = C_pad // Ct

        x = logits
        if (B_pad != B) or (C_pad != C):
            # pad classes with a huge negative value (zero contribution to LSE);
            # padded rows get IGNORE_INDEX targets below so they never count.
            x = jnp.pad(x, ((0, B_pad - B), (0, C_pad - C)),
                        constant_values=_NEG_BIG)
        t = target.astype(jnp.int32).reshape(B, 1)
        if B_pad != B:
            t = jnp.pad(t, ((0, B_pad - B), (0, 0)), constant_values=IGNORE_INDEX)

        padded.append((x, t))
        cts.append(Ct)
        ncts.append(nct_h)

    nct = max(ncts)

    inputs, in_specs, scratch_shapes = [], [], []
    for h in range(n_heads):
        x, t = padded[h]
        inputs += [x, t]
        in_specs.append(pl.BlockSpec((Bt, cts[h]), _logits_index_map(ncts[h], nct)))
        # target block index depends only on the batch axis -> stays resident
        # across all class steps (no per-class-step DMA of a 1-lane block)
        in_specs.append(pl.BlockSpec((Bt, 1), lambda i, k: (i, 0)))
        scratch_shapes += [pltpu.VMEM((Bt, 1), jnp.float32)] * 3   # m, l, tgt_logit

    kernel = _make_fused_ce_kernel(tuple(ncts), nct, nbt)

    sums = pl.pallas_call(
        kernel,
        out_shape=jax.ShapeDtypeStruct((1, 2 * n_heads), jnp.float32),
        grid_spec=pltpu.PrefetchScalarGridSpec(
            num_scalar_prefetch=0,
            grid=(nbt, nct),
            in_specs=in_specs,
            out_specs=pl.BlockSpec(memory_space=pltpu.SMEM),
            scratch_shapes=scratch_shapes,
        ),
        compiler_params=pltpu.CompilerParams(
            # the scalar sum/count accumulator is shared across batch tiles, so
            # both grid axes must be sequential ("arbitrary")
            dimension_semantics=("arbitrary", "arbitrary"),
            vmem_limit_bytes=32 * 1024 * 1024,
        ),
    )(*inputs)

    return [sums[0, 2 * h] / sums[0, 2 * h + 1] for h in range(n_heads)]


def classification_loss(outputs, w_category=1.0, w_topic=1.0, return_dict=False):
    """JAX/Pallas port of ClassificationLoss.forward (fused single kernel launch)."""
    heads, names, weights = [], [], []
    if w_category is not None:
        heads.append((outputs["category_logits"], outputs["category"]))
        names.append("category")
        weights.append(w_category)
    if w_topic is not None:
        heads.append((outputs["topic_logits"], outputs["topic"]))
        names.append("topic")
        weights.append(w_topic)

    losses = fused_cross_entropy_means(heads)

    res = {}
    loss_total, w_total = 0.0, 0.0
    for name, l, w in zip(names, losses, weights):
        res["loss"] = l                      # mirrors res.update(result) in torch code
        res[name + "_loss"] = l
        loss_total = loss_total + l * w
        w_total = w_total + w
    res["loss"] = loss_total / w_total
    # NOTE: if every target of a head is IGNORE_INDEX the head loss is NaN
    # (0/0), matching torch's mean-reduction semantics.
    if return_dict:
        return res
    return res["loss"]


def _ref_ce(logits, target):
    # pure-JAX reference (for sanity check)
    logits = logits.astype(jnp.float32)
    lse = jax.nn.logsumexp(logits, axis=-1)
    safe_t = jnp.where(target == IGNORE_INDEX, 0, target)
    tgt_logit = jnp.take_along_axis(logits, safe_t[:, None], axis=-1)[:, 0]
    valid = target != IGNORE_INDEX
    per = jnp.where(valid, lse - tgt_logit, 0.0)
    return jnp.sum(per) / jnp.sum(valid.astype(jnp.float32))


if __name__ == "__main__":
    key = jax.random.PRNGKey(0)
    k1, k2, k3, k4 = jax.random.split(key, 4)

    B = 8
    NUM_CATEGORIES = 16
    NUM_TOPICS = 32

    category_logits = jax.random.normal(k1, (B, NUM_CATEGORIES), dtype=jnp.float32)
    topic_logits = jax.random.normal(k2, (B, NUM_TOPICS), dtype=jnp.float32)

    category = jax.random.randint(k3, (B,), 0, NUM_CATEGORIES, dtype=jnp.int32)
    topic = jax.random.randint(k4, (B,), 0, NUM_TOPICS, dtype=jnp.int32)
    # sprinkle some ignored targets
    category = category.at[1].set(IGNORE_INDEX)
    topic = topic.at[5].set(IGNORE_INDEX)

    outputs = {
        "category_logits": category_logits,
        "category": category,
        "topic_logits": topic_logits,
        "topic": topic,
    }

    res = classification_loss(outputs, w_category=1.0, w_topic=1.0, return_dict=True)
    loss = jax.block_until_ready(res["loss"])

    # sanity check against a pure-JAX reference
    ref_cat = _ref_ce(category_logits, category)
    ref_top = _ref_ce(topic_logits, topic)
    ref = 0.5 * (ref_cat + ref_top)
    assert jnp.allclose(loss, ref, rtol=1e-5, atol=1e-5), (loss, ref)
    assert jnp.allclose(res["category_loss"], ref_cat, rtol=1e-5, atol=1e-5)
    assert jnp.allclose(res["topic_loss"], ref_top, rtol=1e-5, atol=1e-5)

    print("KERNEL_OK")
</pallas_src>

<mosaic_0001>
module attributes {stable_mosaic.version = 11 : i64} {
  func.func @kernel(%arg0: i32, %arg1: i32, %arg2: memref<8x128xf32, #tpu.memory_space<vmem>>, %arg3: memref<8x1xi32, #tpu.memory_space<vmem>>, %arg4: memref<8x128xf32, #tpu.memory_space<vmem>>, %arg5: memref<8x1xi32, #tpu.memory_space<vmem>>, %arg6: memref<1x4xf32, #tpu.memory_space<smem>>, %arg7: memref<8x1xf32, #tpu.memory_space<vmem>>, %arg8: memref<8x1xf32, #tpu.memory_space<vmem>>, %arg9: memref<8x1xf32, #tpu.memory_space<vmem>>, %arg10: memref<8x1xf32, #tpu.memory_space<vmem>>, %arg11: memref<8x1xf32, #tpu.memory_space<vmem>>, %arg12: memref<8x1xf32, #tpu.memory_space<vmem>>) attributes {dimension_semantics = [#tpu.dimension_semantics<arbitrary>, #tpu.dimension_semantics<arbitrary>], iteration_bounds = array<i64: 1, 1>, scalar_prefetch = 0 : i64, scratch_operands = 6 : i64, tpu.core_type = #tpu.core_type<tc>, window_params = [{transform_indices = @transform_0, window_bounds = array<i64: 8, 128>}, {transform_indices = @transform_1, window_bounds = array<i64: 8, 1>}, {transform_indices = @transform_2, window_bounds = array<i64: 8, 128>}, {transform_indices = @transform_3, window_bounds = array<i64: 8, 1>}, {transform_indices = @transform_4, window_bounds = array<i64: 1, 4>}]} {
    %c0_i32 = arith.constant 0 : i32
    %0 = arith.cmpi eq, %arg0, %c0_i32 : i32
    %c0_i32_0 = arith.constant 0 : i32
    %1 = arith.cmpi eq, %arg1, %c0_i32_0 : i32
    %2 = arith.andi %0, %1 : i1
    %3 = arith.extui %2 : i1 to i32
    %c0_i32_1 = arith.constant 0 : i32
    %4 = arith.cmpi ne, %3, %c0_i32_1 : i32
    scf.if %4 {
      %cst_49 = arith.constant 0.000000e+00 : f32
      %c0_50 = arith.constant 0 : index
      %c0_51 = arith.constant 0 : index
      %79 = memref.load %arg6[%c0_50, %c0_51] : memref<1x4xf32, #tpu.memory_space<smem>>
      memref.store %cst_49, %arg6[%c0_50, %c0_51] : memref<1x4xf32, #tpu.memory_space<smem>>
      %cst_52 = arith.constant 0.000000e+00 : f32
      %c0_53 = arith.constant 0 : index
      %c1 = arith.constant 1 : index
      %80 = memref.load %arg6[%c0_53, %c1] : memref<1x4xf32, #tpu.memory_space<smem>>
      memref.store %cst_52, %arg6[%c0_53, %c1] : memref<1x4xf32, #tpu.memory_space<smem>>
      %cst_54 = arith.constant 0.000000e+00 : f32
      %c0_55 = arith.constant 0 : index
      %c2 = arith.constant 2 : index
      %81 = memref.load %arg6[%c0_55, %c2] : memref<1x4xf32, #tpu.memory_space<smem>>
      memref.store %cst_54, %arg6[%c0_55, %c2] : memref<1x4xf32, #tpu.memory_space<smem>>
      %cst_56 = arith.constant 0.000000e+00 : f32
      %c0_57 = arith.constant 0 : index
      %c3 = arith.constant 3 : index
      %82 = memref.load %arg6[%c0_57, %c3] : memref<1x4xf32, #tpu.memory_space<smem>>
      memref.store %cst_56, %arg6[%c0_57, %c3] : memref<1x4xf32, #tpu.memory_space<smem>>
    } else {
    }
    %c0_i32_2 = arith.constant 0 : i32
    %5 = arith.cmpi eq, %arg1, %c0_i32_2 : i32
    %6 = arith.extui %5 : i1 to i32
    %c0_i32_3 = arith.constant 0 : i32
    %7 = arith.cmpi ne, %6, %c0_i32_3 : i32
    scf.if %7 {
      %cst_49 = arith.constant -1.000000e+30 : f32
      %79 = vector.broadcast %cst_49 : f32 to vector<8x1xf32>
      %c0_50 = arith.constant 0 : index
      %c0_51 = arith.constant 0 : index
      %80 = vector.load %arg7[%c0_50, %c0_51] : memref<8x1xf32, #tpu.memory_space<vmem>>, vector<8x1xf32>
      tpu.vector_store %arg7[%c0_50, %c0_51], %79 {strides = array<i32>} : memref<8x1xf32, #tpu.memory_space<vmem>>, vector<8x1xf32>,
      %cst_52 = arith.constant 0.000000e+00 : f32
      %81 = vector.broadcast %cst_52 : f32 to vector<8x1xf32>
      %c0_53 = arith.constant 0 : index
      %c0_54 = arith.constant 0 : index
      %82 = vector.load %arg8[%c0_53, %c0_54] : memref<8x1xf32, #tpu.memory_space<vmem>>, vector<8x1xf32>
      tpu.vector_store %arg8[%c0_53, %c0_54], %81 {strides = array<i32>} : memref<8x1xf32, #tpu.memory_space<vmem>>, vector<8x1xf32>,
      %cst_55 = arith.constant 0.000000e+00 : f32
      %83 = vector.broadcast %cst_55 : f32 to vector<8x1xf32>
      %c0_56 = arith.constant 0 : index
      %c0_57 = arith.constant 0 : index
      %84 = vector.load %arg9[%c0_56, %c0_57] : memref<8x1xf32, #tpu.memory_space<vmem>>, vector<8x1xf32>
      tpu.vector_store %arg9[%c0_56, %c0_57], %83 {strides = array<i32>} : memref<8x1xf32, #tpu.memory_space<vmem>>, vector<8x1xf32>,
    } else {
    }
    %c0 = arith.constant 0 : index
    %c0_4 = arith.constant 0 : index
    %8 = vector.load %arg2[%c0, %c0_4] : memref<8x128xf32, #tpu.memory_space<vmem>>, vector<8x128xf32>
    %c0_5 = arith.constant 0 : index
    %c0_6 = arith.constant 0 : index
    %9 = vector.load %arg3[%c0_5, %c0_6] : memref<8x1xi32, #tpu.memory_space<vmem>>, vector<8x1xi32>
    %c0_7 = arith.constant 0 : index
    %c0_8 = arith.constant 0 : index
    %10 = vector.load %arg7[%c0_7, %c0_8] : memref<8x1xf32, #tpu.memory_space<vmem>>, vector<8x1xf32>
    %cst = arith.constant dense<0xFF800000> : vector<8xf32>
    %11 = vector.multi_reduction <maximumf>, %8, %cst [1] : vector<8x128xf32> to vector<8xf32>
    %12 = vector.shape_cast %11 : vector<8xf32> to vector<8x1xf32>
    %13 = arith.maximumf %10, %12 : vector<8x1xf32>
    %c0_9 = arith.constant 0 : index
    %c0_10 = arith.constant 0 : index
    %14 = vector.load %arg8[%c0_9, %c0_10] : memref<8x1xf32, #tpu.memory_space<vmem>>, vector<8x1xf32>
    %15 = arith.subf %10, %13 : vector<8x1xf32>
    %16 = math.exp %15 : vector<8x1xf32>
    %17 = arith.mulf %14, %16 : vector<8x1xf32>
    %18 = vector.broadcast %13 : vector<8x1xf32> to vector<8x128xf32>
    %19 = arith.subf %8, %18 : vector<8x128xf32>
    %20 = math.exp %19 : vector<8x128xf32>
    %cst_11 = arith.constant dense<0.000000e+00> : vector<8xf32>
    %21 = vector.multi_reduction <add>, %20, %cst_11 [1] : vector<8x128xf32> to vector<8xf32>
    %22 = vector.shape_cast %21 : vector<8xf32> to vector<8x1xf32>
    %23 = arith.addf %17, %22 : vector<8x1xf32>
    %c0_12 = arith.constant 0 : index
    %c0_13 = arith.constant 0 : index
    %24 = vector.load %arg8[%c0_12, %c0_13] : memref<8x1xf32, #tpu.memory_space<vmem>>, vector<8x1xf32>
    tpu.vector_store %arg8[%c0_12, %c0_13], %23 {strides = array<i32>} : memref<8x1xf32, #tpu.memory_space<vmem>>, vector<8x1xf32>,
    %c0_14 = arith.constant 0 : index
    %c0_15 = arith.constant 0 : index
    %25 = vector.load %arg7[%c0_14, %c0_15] : memref<8x1xf32, #tpu.memory_space<vmem>>, vector<8x1xf32>
    tpu.vector_store %arg7[%c0_14, %c0_15], %13 {strides = array<i32>} : memref<8x1xf32, #tpu.memory_space<vmem>>, vector<8x1xf32>,
    %26 = tpu.iota {dimensions = array<i32: 1>} : vector<8x128xi32>
    %c128_i32 = arith.constant 128 : i32
    %27 = arith.muli %arg1, %c128_i32 : i32
    %28 = vector.broadcast %27 : i32 to vector<8x128xi32>
    %29 = arith.addi %26, %28 : vector<8x128xi32>
    %c0_16 = arith.constant 0 : index
    %c0_17 = arith.constant 0 : index
    %30 = vector.load %arg9[%c0_16, %c0_17] : memref<8x1xf32, #tpu.memory_space<vmem>>, vector<8x1xf32>
    %31 = vector.broadcast %9 : vector<8x1xi32> to vector<8x128xi32>
    %32 = arith.cmpi eq, %29, %31 : vector<8x128xi32>
    %cst_18 = arith.constant 0.000000e+00 : f32
    %33 = vector.broadcast %cst_18 : f32 to vector<8x128xf32>
    %34 = arith.select %32, %8, %33 : vector<8x128xi1>, vector<8x128xf32>
    %cst_19 = arith.constant dense<0.000000e+00> : vector<8xf32>
    %35 = vector.multi_reduction <add>, %34, %cst_19 [1] : vector<8x128xf32> to vector<8xf32>
    %36 = vector.shape_cast %35 : vector<8xf32> to vector<8x1xf32>
    %37 = arith.addf %30, %36 : vector<8x1xf32>
    %c0_20 = arith.constant 0 : index
    %c0_21 = arith.constant 0 : index
    %38 = vector.load %arg9[%c0_20, %c0_21] : memref<8x1xf32, #tpu.memory_space<vmem>>, vector<8x1xf32>
    tpu.vector_store %arg9[%c0_20, %c0_21], %37 {strides = array<i32>} : memref<8x1xf32, #tpu.memory_space<vmem>>, vector<8x1xf32>,
    %c0_i32_22 = arith.constant 0 : i32
    %39 = arith.cmpi eq, %arg1, %c0_i32_22 : i32
    %40 = arith.extui %39 : i1 to i32
    %c0_i32_23 = arith.constant 0 : i32
    %41 = arith.cmpi ne, %40, %c0_i32_23 : i32
    scf.if %41 {
      %c0_49 = arith.constant 0 : index
      %c0_50 = arith.constant 0 : index
      %79 = vector.load %arg3[%c0_49, %c0_50] : memref<8x1xi32, #tpu.memory_space<vmem>>, vector<8x1xi32>
      %c-100_i32 = arith.constant -100 : i32
      %80 = vector.broadcast %c-100_i32 : i32 to vector<8x1xi32>
      %81 = arith.cmpi ne, %79, %80 : vector<8x1xi32>
      %c0_51 = arith.constant 0 : index
      %c0_52 = arith.constant 0 : index
      %82 = vector.load %arg7[%c0_51, %c0_52] : memref<8x1xf32, #tpu.memory_space<vmem>>, vector<8x1xf32>
      %c0_53 = arith.constant 0 : index
      %c0_54 = arith.constant 0 : index
      %83 = vector.load %arg8[%c0_53, %c0_54] : memref<8x1xf32, #tpu.memory_space<vmem>>, vector<8x1xf32>
      %84 = math.log %83 : vector<8x1xf32>
      %85 = arith.addf %82, %84 : vector<8x1xf32>
      %c0_55 = arith.constant 0 : index
      %c0_56 = arith.constant 0 : index
      %86 = vector.load %arg9[%c0_55, %c0_56] : memref<8x1xf32, #tpu.memory_space<vmem>>, vector<8x1xf32>
      %87 = arith.subf %85, %86 : vector<8x1xf32>
      %cst_57 = arith.constant 0.000000e+00 : f32
      %88 = vector.broadcast %cst_57 : f32 to vector<8x1xf32>
      %89 = arith.select %81, %87, %88 : vector<8x1xi1>, vector<8x1xf32>
      %c0_58 = arith.constant 0 : index
      %c0_59 = arith.constant 0 : index
      %90 = memref.load %arg6[%c0_58, %c0_59] : memref<1x4xf32, #tpu.memory_space<smem>>
      %91 = vector.shape_cast %89 : vector<8x1xf32> to vector<1x8x1xf32>
      %cst_60 = arith.constant dense<0.000000e+00> : vector<1xf32>
      %92 = vector.multi_reduction <add>, %91, %cst_60 [1, 2] : vector<1x8x1xf32> to vector<1xf32>
      %93 = vector.shape_cast %92 : vector<1xf32> to vector<1x1x1xf32>
      %94 = vector.extract %93[0, 0, 0] : f32 from vector<1x1x1xf32>
      %95 = arith.addf %90, %94 : f32
      %c0_61 = arith.constant 0 : index
      %c0_62 = arith.constant 0 : index
      %96 = memref.load %arg6[%c0_61, %c0_62] : memref<1x4xf32, #tpu.memory_space<smem>>
      memref.store %95, %arg6[%c0_61, %c0_62] : memref<1x4xf32, #tpu.memory_space<smem>>
      %c0_63 = arith.constant 0 : index
      %c1 = arith.constant 1 : index
      %97 = memref.load %arg6[%c0_63, %c1] : memref<1x4xf32, #tpu.memory_space<smem>>
      %98 = arith.extui %81 : vector<8x1xi1> to vector<8x1xi32>
      %99 = arith.sitofp %98 : vector<8x1xi32> to vector<8x1xf32>
      %100 = vector.shape_cast %99 : vector<8x1xf32> to vector<1x8x1xf32>
      %cst_64 = arith.constant dense<0.000000e+00> : vector<1xf32>
      %101 = vector.multi_reduction <add>, %100, %cst_64 [1, 2] : vector<1x8x1xf32> to vector<1xf32>
      %102 = vector.shape_cast %101 : vector<1xf32> to vector<1x1x1xf32>
      %103 = vector.extract %102[0, 0, 0] : f32 from vector<1x1x1xf32>
      %104 = arith.addf %97, %103 : f32
      %c0_65 = arith.constant 0 : index
      %c1_66 = arith.constant 1 : index
      %105 = memref.load %arg6[%c0_65, %c1_66] : memref<1x4xf32, #tpu.memory_space<smem>>
      memref.store %104, %arg6[%c0_65, %c1_66] : memref<1x4xf32, #tpu.memory_space<smem>>
    } else {
    }
    %c0_i32_24 = arith.constant 0 : i32
    %42 = arith.cmpi eq, %arg1, %c0_i32_24 : i32
    %43 = arith.extui %42 : i1 to i32
    %c0_i32_25 = arith.constant 0 : i32
    %44 = arith.cmpi ne, %43, %c0_i32_25 : i32
    scf.if %44 {
      %cst_49 = arith.constant -1.000000e+30 : f32
      %79 = vector.broadcast %cst_49 : f32 to vector<8x1xf32>
      %c0_50 = arith.constant 0 : index
      %c0_51 = arith.constant 0 : index
      %80 = vector.load %arg10[%c0_50, %c0_51] : memref<8x1xf32, #tpu.memory_space<vmem>>, vector<8x1xf32>
      tpu.vector_store %arg10[%c0_50, %c0_51], %79 {strides = array<i32>} : memref<8x1xf32, #tpu.memory_space<vmem>>, vector<8x1xf32>,
      %cst_52 = arith.constant 0.000000e+00 : f32
      %81 = vector.broadcast %cst_52 : f32 to vector<8x1xf32>
      %c0_53 = arith.constant 0 : index
      %c0_54 = arith.constant 0 : index
      %82 = vector.load %arg11[%c0_53, %c0_54] : memref<8x1xf32, #tpu.memory_space<vmem>>, vector<8x1xf32>
      tpu.vector_store %arg11[%c0_53, %c0_54], %81 {strides = array<i32>} : memref<8x1xf32, #tpu.memory_space<vmem>>, vector<8x1xf32>,
      %cst_55 = arith.constant 0.000000e+00 : f32
      %83 = vector.broadcast %cst_55 : f32 to vector<8x1xf32>
      %c0_56 = arith.constant 0 : index
      %c0_57 = arith.constant 0 : index
      %84 = vector.load %arg12[%c0_56, %c0_57] : memref<8x1xf32, #tpu.memory_space<vmem>>, vector<8x1xf32>
      tpu.vector_store %arg12[%c0_56, %c0_57], %83 {strides = array<i32>} : memref<8x1xf32, #tpu.memory_space<vmem>>, vector<8x1xf32>,
    } else {
    }
    %c0_26 = arith.constant 0 : index
    %c0_27 = arith.constant 0 : index
    %45 = vector.load %arg4[%c0_26, %c0_27] : memref<8x128xf32, #tpu.memory_space<vmem>>, vector<8x128xf32>
    %c0_28 = arith.constant 0 : index
    %c0_29 = arith.constant 0 : index
    %46 = vector.load %arg5[%c0_28, %c0_29] : memref<8x1xi32, #tpu.memory_space<vmem>>, vector<8x1xi32>
    %c0_30 = arith.constant 0 : index
    %c0_31 = arith.constant 0 : index
    %47 = vector.load %arg10[%c0_30, %c0_31] : memref<8x1xf32, #tpu.memory_space<vmem>>, vector<8x1xf32>
    %cst_32 = arith.constant dense<0xFF800000> : vector<8xf32>
    %48 = vector.multi_reduction <maximumf>, %45, %cst_32 [1] : vector<8x128xf32> to vector<8xf32>
    %49 = vector.shape_cast %48 : vector<8xf32> to vector<8x1xf32>
    %50 = arith.maximumf %47, %49 : vector<8x1xf32>
    %c0_33 = arith.constant 0 : index
    %c0_34 = arith.constant 0 : index
    %51 = vector.load %arg11[%c0_33, %c0_34] : memref<8x1xf32, #tpu.memory_space<vmem>>, vector<8x1xf32>
    %52 = arith.subf %47, %50 : vector<8x1xf32>
    %53 = math.exp %52 : vector<8x1xf32>
    %54 = arith.mulf %51, %53 : vector<8x1xf32>
    %55 = vector.broadcast %50 : vector<8x1xf32> to vector<8x128xf32>
    %56 = arith.subf %45, %55 : vector<8x128xf32>
    %57 = math.exp %56 : vector<8x128xf32>
    %cst_35 = arith.constant dense<0.000000e+00> : vector<8xf32>
    %58 = vector.multi_reduction <add>, %57, %cst_35 [1] : vector<8x128xf32> to vector<8xf32>
    %59 = vector.shape_cast %58 : vector<8xf32> to vector<8x1xf32>
    %60 = arith.addf %54, %59 : vector<8x1xf32>
    %c0_36 = arith.constant 0 : index
    %c0_37 = arith.constant 0 : index
    %61 = vector.load %arg11[%c0_36, %c0_37] : memref<8x1xf32, #tpu.memory_space<vmem>>, vector<8x1xf32>
    tpu.vector_store %arg11[%c0_36, %c0_37], %60 {strides = array<i32>} : memref<8x1xf32, #tpu.memory_space<vmem>>, vector<8x1xf32>,
    %c0_38 = arith.constant 0 : index
    %c0_39 = arith.constant 0 : index
    %62 = vector.load %arg10[%c0_38, %c0_39] : memref<8x1xf32, #tpu.memory_space<vmem>>, vector<8x1xf32>
    tpu.vector_store %arg10[%c0_38, %c0_39], %50 {strides = array<i32>} : memref<8x1xf32, #tpu.memory_space<vmem>>, vector<8x1xf32>,
    %63 = tpu.iota {dimensions = array<i32: 1>} : vector<8x128xi32>
    %c128_i32_40 = arith.constant 128 : i32
    %64 = arith.muli %arg1, %c128_i32_40 : i32
    %65 = vector.broadcast %64 : i32 to vector<8x128xi32>
    %66 = arith.addi %63, %65 : vector<8x128xi32>
    %c0_41 = arith.constant 0 : index
    %c0_42 = arith.constant 0 : index
    %67 = vector.load %arg12[%c0_41, %c0_42] : memref<8x1xf32, #tpu.memory_space<vmem>>, vector<8x1xf32>
    %68 = vector.broadcast %46 : vector<8x1xi32> to vector<8x128xi32>
    %69 = arith.cmpi eq, %66, %68 : vector<8x128xi32>
    %cst_43 = arith.constant 0.000000e+00 : f32
    %70 = vector.broadcast %cst_43 : f32 to vector<8x128xf32>
    %71 = arith.select %69, %45, %70 : vector<8x128xi1>, vector<8x128xf32>
    %cst_44 = arith.constant dense<0.000000e+00> : vector<8xf32>
    %72 = vector.multi_reduction <add>, %71, %cst_44 [1] : vector<8x128xf32> to vector<8xf32>
    %73 = vector.shape_cast %72 : vector<8xf32> to vector<8x1xf32>
    %74 = arith.addf %67, %73 : vector<8x1xf32>
    %c0_45 = arith.constant 0 : index
    %c0_46 = arith.constant 0 : index
    %75 = vector.load %arg12[%c0_45, %c0_46] : memref<8x1xf32, #tpu.memory_space<vmem>>, vector<8x1xf32>
    tpu.vector_store %arg12[%c0_45, %c0_46], %74 {strides = array<i32>} : memref<8x1xf32, #tpu.memory_space<vmem>>, vector<8x1xf32>,
    %c0_i32_47 = arith.constant 0 : i32
    %76 = arith.cmpi eq, %arg1, %c0_i32_47 : i32
    %77 = arith.extui %76 : i1 to i32
    %c0_i32_48 = arith.constant 0 : i32
    %78 = arith.cmpi ne, %77, %c0_i32_48 : i32
    scf.if %78 {
      %c0_49 = arith.constant 0 : index
      %c0_50 = arith.constant 0 : index
      %79 = vector.load %arg5[%c0_49, %c0_50] : memref<8x1xi32, #tpu.memory_space<vmem>>, vector<8x1xi32>
      %c-100_i32 = arith.constant -100 : i32
      %80 = vector.broadcast %c-100_i32 : i32 to vector<8x1xi32>
      %81 = arith.cmpi ne, %79, %80 : vector<8x1xi32>
      %c0_51 = arith.constant 0 : index
      %c0_52 = arith.constant 0 : index
      %82 = vector.load %arg10[%c0_51, %c0_52] : memref<8x1xf32, #tpu.memory_space<vmem>>, vector<8x1xf32>
      %c0_53 = arith.constant 0 : index
      %c0_54 = arith.constant 0 : index
      %83 = vector.load %arg11[%c0_53, %c0_54] : memref<8x1xf32, #tpu.memory_space<vmem>>, vector<8x1xf32>
      %84 = math.log %83 : vector<8x1xf32>
      %85 = arith.addf %82, %84 : vector<8x1xf32>
      %c0_55 = arith.constant 0 : index
      %c0_56 = arith.constant 0 : index
      %86 = vector.load %arg12[%c0_55, %c0_56] : memref<8x1xf32, #tpu.memory_space<vmem>>, vector<8x1xf32>
      %87 = arith.subf %85, %86 : vector<8x1xf32>
      %cst_57 = arith.constant 0.000000e+00 : f32
      %88 = vector.broadcast %cst_57 : f32 to vector<8x1xf32>
      %89 = arith.select %81, %87, %88 : vector<8x1xi1>, vector<8x1xf32>
      %c0_58 = arith.constant 0 : index
      %c2 = arith.constant 2 : index
      %90 = memref.load %arg6[%c0_58, %c2] : memref<1x4xf32, #tpu.memory_space<smem>>
      %91 = vector.shape_cast %89 : vector<8x1xf32> to vector<1x8x1xf32>
      %cst_59 = arith.constant dense<0.000000e+00> : vector<1xf32>
      %92 = vector.multi_reduction <add>, %91, %cst_59 [1, 2] : vector<1x8x1xf32> to vector<1xf32>
      %93 = vector.shape_cast %92 : vector<1xf32> to vector<1x1x1xf32>
      %94 = vector.extract %93[0, 0, 0] : f32 from vector<1x1x1xf32>
      %95 = arith.addf %90, %94 : f32
      %c0_60 = arith.constant 0 : index
      %c2_61 = arith.constant 2 : index
      %96 = memref.load %arg6[%c0_60, %c2_61] : memref<1x4xf32, #tpu.memory_space<smem>>
      memref.store %95, %arg6[%c0_60, %c2_61] : memref<1x4xf32, #tpu.memory_space<smem>>
      %c0_62 = arith.constant 0 : index
      %c3 = arith.constant 3 : index
      %97 = memref.load %arg6[%c0_62, %c3] : memref<1x4xf32, #tpu.memory_space<smem>>
      %98 = arith.extui %81 : vector<8x1xi1> to vector<8x1xi32>
      %99 = arith.sitofp %98 : vector<8x1xi32> to vector<8x1xf32>
      %100 = vector.shape_cast %99 : vector<8x1xf32> to vector<1x8x1xf32>
      %cst_63 = arith.constant dense<0.000000e+00> : vector<1xf32>
      %101 = vector.multi_reduction <add>, %100, %cst_63 [1, 2] : vector<1x8x1xf32> to vector<1xf32>
      %102 = vector.shape_cast %101 : vector<1xf32> to vector<1x1x1xf32>
      %103 = vector.extract %102[0, 0, 0] : f32 from vector<1x1x1xf32>
      %104 = arith.addf %97, %103 : f32
      %c0_64 = arith.constant 0 : index
      %c3_65 = arith.constant 3 : index
      %105 = memref.load %arg6[%c0_64, %c3_65] : memref<1x4xf32, #tpu.memory_space<smem>>
      memref.store %104, %arg6[%c0_64, %c3_65] : memref<1x4xf32, #tpu.memory_space<smem>>
    } else {
    }
    return
  }
  func.func @transform_0(%arg0: i32, %arg1: i32) -> (i32, i32) {
    %c0_i32 = arith.constant 0 : i32
    return %arg0, %arg1 : i32, i32
  }
  func.func @transform_1(%arg0: i32, %arg1: i32) -> (i32, i32) {
    %c0_i32 = arith.constant 0 : i32
    %c0_i32_0 = arith.constant 0 : i32
    return %arg0, %c0_i32 : i32, i32
  }
  func.func @transform_2(%arg0: i32, %arg1: i32) -> (i32, i32) {
    %c0_i32 = arith.constant 0 : i32
    return %arg0, %arg1 : i32, i32
  }
  func.func @transform_3(%arg0: i32, %arg1: i32) -> (i32, i32) {
    %c0_i32 = arith.constant 0 : i32
    %c0_i32_0 = arith.constant 0 : i32
    return %arg0, %c0_i32 : i32, i32
  }
  func.func @transform_4(%arg0: i32, %arg1: i32) -> (i32, i32) {
    %c0_i32 = arith.constant 0 : i32
    %c0_i32_0 = arith.constant 0 : i32
    %c0_i32_1 = arith.constant 0 : i32
    return %c0_i32, %c0_i32_0 : i32, i32
  }
}

</mosaic_0001>

<llo_original>
// kernel: tpu_custom_call.1
$region0: #{tpu_custom_call.1}
  #allocation0 [shape = 'u32[]', space=smem, size = 0x4, offset = 0x4, fixed_abs, tag = 'smem constant byte address 0x4 - core index']
  #allocation1 [shape = 'u32[144,128]{1,0:T(1,128)}', space=vmem, size = 0x12000, scoped, tag = 'internal scratch']
  #allocation2 [shape = 'f32[8,1]{1,0:T(8,128)}', space=vmem, size = 0x1000, scoped, tag = 'scratch operand']
  #allocation3 [shape = 'f32[8,1]{1,0:T(8,128)}', space=vmem, size = 0x1000, scoped, tag = 'scratch operand']
  #allocation4 [shape = 'f32[8,1]{1,0:T(8,128)}', space=vmem, size = 0x1000, scoped, tag = 'scratch operand']
  #allocation5 [shape = 'f32[8,1]{1,0:T(8,128)}', space=vmem, size = 0x1000, scoped, tag = 'scratch operand']
  #allocation6 [shape = 'f32[8,1]{1,0:T(8,128)}', space=vmem, size = 0x1000, scoped, tag = 'scratch operand']
  #allocation7 [shape = 'f32[8,1]{1,0:T(8,128)}', space=vmem, size = 0x1000, scoped, tag = 'scratch operand']
  %s0 = inlined_call_operand.vmem [shape: f32[8,128], index: 0, kind: input, shape index: {}]
  %s1 = inlined_call_operand.vmem [shape: s32[8,1], index: 1, kind: input, shape index: {}]
  %s2 = inlined_call_operand.vmem [shape: f32[8,128], index: 2, kind: input, shape index: {}]
  %s3 = inlined_call_operand.vmem [shape: s32[8,1], index: 3, kind: input, shape index: {}]
  %s4 = inlined_call_operand.hbm [shape: f32[1,4], index: 4, kind: output, shape index: {}]
  %s5 = sld [smem:[#allocation0]]
  $region42: #{tpu_custom_call.1} parent=0
    _
  %s7 = ssub.s32 1, %s5
  %s8 = scalar_select 0, %s7, %s5
  $region1: #{tpu_custom_call.1} parent=0
    #allocation8 [shape = 'u8[512]{0}', space=smem, size = 0x200, scoped, tag = 'output window, operand 0, single buffered']
    #allocation9 [shape = 's32[1]{0}', space=sflag, size = 0x4, scoped, tag = 'scoped memory for tpu_custom_call.1']
    %9 = vsyncpa [#allocation9], 0
    // Predicated region
    $region2: #{tpu_custom_call.1} parent=1 // pred_check
      _
    $region3: #{tpu_custom_call.1} parent=1 // pred_check_branch
      %11 = sbr.rel (0) target = $region5
    $region4: #{tpu_custom_call.1} parent=1 // pred_region
      _
    $region5: #{tpu_custom_call.1} parent=1 // pred_fallthru
      _
    // Predicated region
    $region6: #{tpu_custom_call.1} parent=1 // pred_check
      _
    $region7: #{tpu_custom_call.1} parent=1 // pred_check_branch
      %13 = sbr.rel (0) target = $region9
    $region8: #{tpu_custom_call.1} parent=1 // pred_region
      _
    $region9: #{tpu_custom_call.1} parent=1 // pred_fallthru
      _
    // Predicated region
    $region10: #{tpu_custom_call.1} parent=1 // pred_check
      _
    $region11: #{tpu_custom_call.1} parent=1 // pred_check_branch
      %15 = sbr.rel (0) target = $region13
    $region12: #{tpu_custom_call.1} parent=1 // pred_region
      _
    $region13: #{tpu_custom_call.1} parent=1 // pred_fallthru
      _
    // Predicated region
    $region14: #{tpu_custom_call.1} parent=1 // pred_check
      _
    $region15: #{tpu_custom_call.1} parent=1 // pred_check_branch
      %17 = sbr.rel (0) target = $region17
    $region16: #{tpu_custom_call.1} parent=1 // pred_region
      _
    $region17: #{tpu_custom_call.1} parent=1 // pred_fallthru
      _
    %p18 = scmp.eq.s32.totalorder 0, 0
    %p19 = scmp.eq.s32.totalorder 0, 0
    %p20 = pnand %p18, %p19
    %p21 = pneg %p20
    // Predicated region
    $region18: #{tpu_custom_call.1} parent=1 // pred_check
      _
    $region19: #{tpu_custom_call.1} parent=1 // pred_check_branch
      %23 = sbr.rel (%p20) target = $region21
    $region20: #{tpu_custom_call.1} parent=1 // pred_region
      %s24 = scalar_lea.smem [#allocation8], 0
      %25 = sst [smem:[%s24]] 0.0
      %s26 = scalar_lea.smem [#allocation8], 1
      %27 = sst [smem:[%s26]] 0.0
      %s28 = scalar_lea.smem [#allocation8], 2
      %29 = sst [smem:[%s28]] 0.0
      %s30 = scalar_lea.smem [#allocation8], 3
      %31 = sst [smem:[%s30]] 0.0
    $region21: #{tpu_custom_call.1} parent=1 // pred_fallthru
      _
    // Predicated region
    $region22: #{tpu_custom_call.1} parent=1 // pred_check
      %p32 = pneg %p19
    $region23: #{tpu_custom_call.1} parent=1 // pred_check_branch
      %34 = sbr.rel (%p32) target = $region25
    $region24: #{tpu_custom_call.1} parent=1 // pred_region
      %vm35 = vcmask 7168
      %36 = vst.msk [vmem:[#allocation2] sm:$0xff] %vm35, -1e+30
      %37 = vst.msk [vmem:[#allocation3] sm:$0xff] %vm35, 0.0
      %38 = vst.msk [vmem:[#allocation4] sm:$0xff] %vm35, 0.0
    $region25: #{tpu_custom_call.1} parent=1 // pred_fallthru
      _
    %v39 = vld [vmem:[%s0] sm:$0xff]
    %v40 = vld [vmem:[%s1] sm:$0xff]
    %v41 = vld [vmem:[#allocation2] sm:$0xff]
    %42 = vmax.xlane.f32.xlu0 %v39
    %v43 = vpop.xlane.xlu0 %42
    %v44 = vmax.f32 %v41, %v43
    %v45 = vld [vmem:[#allocation3] sm:$0xff]
    %v46 = vsub.f32 %v41, %v44
    %v47 = vmul.f32 %v46, 1.442695
    %v48 = vpow.pop %v47
    %v49 = vmul.f32 %v45, %v48
    %51 = vset.pattern.permute.xlu0 0
    %52 = vperm.xlu0 %51, %v44
    %v53 = vpop.permute.xlu0 %52
    %v55 = vsub.f32 %v39, %v53
    %v56 = vmul.f32 %v55, 1.442695
    %v57 = vpow.pop %v56
    %58 = vadd.xlane.f32.xlu0 %v57
    %v59 = vpop.xlane.xlu0 %58
    %v60 = vadd.f32 %v49, %v59
    %vm61 = vcmask 7168
    %62 = vst.msk [vmem:[#allocation3] sm:$0xff] %vm61, %v60
    %63 = vst.msk [vmem:[#allocation2] sm:$0xff] %vm61, %v44
    %v64 = vlaneseq
    %v65 = vand.u32 %v64, 127
    %s66 = smul.u32 0, 128
    %v67 = vstv %s66
    %v68 = vadd.s32 %v65, %v67
    %v69 = vld [vmem:[#allocation4] sm:$0xff]
    %70 = vset.pattern.permute.xlu0 0
    %71 = vperm.xlu0 %70, %v40
    %v72 = vpop.permute.xlu0 %71
    %vm73 = vcmp.eq.s32.totalorder %v68, %v72
    %v74 = vsel %vm73, %v39, 0.0
    %75 = vadd.xlane.f32.xlu0 %v74
    %v76 = vpop.xlane.xlu0 %75
    %v77 = vadd.f32 %v69, %v76
    %78 = vst.msk [vmem:[#allocation4] sm:$0xff] %vm61, %v77
    // Predicated region
    $region26: #{tpu_custom_call.1} parent=1 // pred_check
      %p79 = pneg %p19
    $region27: #{tpu_custom_call.1} parent=1 // pred_check_branch
      %81 = sbr.rel (%p79) target = $region29
    $region28: #{tpu_custom_call.1} parent=1 // pred_region
      %v82 = vld [vmem:[%s1] sm:$0xff]
      %vm83 = vcmp.ne.s32.totalorder %v82, 4294967196
      %v84 = vld [vmem:[#allocation2] sm:$0xff]
      %v85 = vld [vmem:[#allocation3] sm:$0xff]
      %v86 = vlog2.pop %v85
      %v87 = vmul.f32 %v86, 0.6931472
      %v88 = vadd.f32 %v84, %v87
      %v89 = vld [vmem:[#allocation4] sm:$0xff]
      %v90 = vsub.f32 %v88, %v89
      %v91 = vsel %vm83, %v90, 0.0
      %s92 = sld [smem:[#allocation8]]
      %v93 = vsel %vm61, %v91, 0.0
      %94 = vadd.xlane.f32.xlu0 %v93
      %v95 = vpop.xlane.xlu0 %94
      %v96 = vrot.slane %v95, 4
      %v97 = vadd.f32 %v95, %v96
      %v98 = vrot.slane %v97, 2
      %v99 = vadd.f32 %v97, %v98
      %v100 = vrot.slane %v99, 1
      %v101 = vadd.f32 %v99, %v100
      %s102 = vtos %v101
      %s103 = sadd.f32 %s92, %s102
      %s104 = scalar_lea.smem [#allocation8], 0
      %105 = sst [smem:[%s104]] %s103
      %s106 = sld [smem:[#allocation8 + $0x1]]
      %v107 = vsel %vm83, 1, 0
      %v108 = vcvt.s32.f32 %v107
      %v109 = vsel %vm61, %v108, 0.0
      %110 = vadd.xlane.f32.xlu0 %v109
      %v111 = vpop.xlane.xlu0 %110
      %v112 = vrot.slane %v111, 4
      %v113 = vadd.f32 %v111, %v112
      %v114 = vrot.slane %v113, 2
      %v115 = vadd.f32 %v113, %v114
      %v116 = vrot.slane %v115, 1
      %v117 = vadd.f32 %v115, %v116
      %s118 = vtos %v117
      %s119 = sadd.f32 %s106, %s118
      %s120 = scalar_lea.smem [#allocation8], 1
      %121 = sst [smem:[%s120]] %s119
      %122 = vst.msk [vmem:[#allocation5] sm:$0xff] %vm61, -1e+30
      %123 = vst.msk [vmem:[#allocation6] sm:$0xff] %vm61, 0.0
      %124 = vst.msk [vmem:[#allocation7] sm:$0xff] %vm61, 0.0
    $region29: #{tpu_custom_call.1} parent=1 // pred_fallthru
      _
    %v125 = vld [vmem:[%s2] sm:$0xff]
    %v126 = vld [vmem:[%s3] sm:$0xff]
    %v127 = vld [vmem:[#allocation5] sm:$0xff]
    %128 = vmax.xlane.f32.xlu0 %v125
    %v129 = vpop.xlane.xlu0 %128
    %v130 = vmax.f32 %v127, %v129
    %v131 = vld [vmem:[#allocation6] sm:$0xff]
    %v132 = vsub.f32 %v127, %v130
    %v133 = vmul.f32 %v132, 1.442695
    %v134 = vpow.pop %v133
    %v135 = vmul.f32 %v131, %v134
    %137 = vset.pattern.permute.xlu0 0
    %138 = vperm.xlu0 %137, %v130
    %v139 = vpop.permute.xlu0 %138
    %v141 = vsub.f32 %v125, %v139
    %v142 = vmul.f32 %v141, 1.442695
    %v143 = vpow.pop %v142
    %144 = vadd.xlane.f32.xlu0 %v143
    %v145 = vpop.xlane.xlu0 %144
    %v146 = vadd.f32 %v135, %v145
    %147 = vst.msk [vmem:[#allocation6] sm:$0xff] %vm61, %v146
    %148 = vst.msk [vmem:[#allocation5] sm:$0xff] %vm61, %v130
    %v149 = vld [vmem:[#allocation7] sm:$0xff]
    %150 = vset.pattern.permute.xlu0 0
    %151 = vperm.xlu0 %150, %v126
    %v152 = vpop.permute.xlu0 %151
    %vm153 = vcmp.eq.s32.totalorder %v68, %v152
    %v154 = vsel %vm153, %v125, 0.0
    %155 = vadd.xlane.f32.xlu0 %v154
    %v156 = vpop.xlane.xlu0 %155
    %v157 = vadd.f32 %v149, %v156
    %158 = vst.msk [vmem:[#allocation7] sm:$0xff] %vm61, %v157
    // Predicated region
    $region30: #{tpu_custom_call.1} parent=1 // pred_check
      %p159 = pneg %p19
    $region31: #{tpu_custom_call.1} parent=1 // pred_check_branch
      %161 = sbr.rel (%p159) target = $region33
    $region32: #{tpu_custom_call.1} parent=1 // pred_region
      %v162 = vld [vmem:[%s3] sm:$0xff]
      %vm163 = vcmp.ne.s32.totalorder %v162, 4294967196
      %v164 = vld [vmem:[#allocation5] sm:$0xff]
      %v165 = vld [vmem:[#allocation6] sm:$0xff]
      %v166 = vlog2.pop %v165
      %v167 = vmul.f32 %v166, 0.6931472
      %v168 = vadd.f32 %v164, %v167
      %v169 = vld [vmem:[#allocation7] sm:$0xff]
      %v170 = vsub.f32 %v168, %v169
      %v171 = vsel %vm163, %v170, 0.0
      %s172 = sld [smem:[#allocation8 + $0x2]]
      %v173 = vsel %vm61, %v171, 0.0
      %174 = vadd.xlane.f32.xlu0 %v173
      %v175 = vpop.xlane.xlu0 %174
      %v176 = vrot.slane %v175, 4
      %v177 = vadd.f32 %v175, %v176
      %v178 = vrot.slane %v177, 2
      %v179 = vadd.f32 %v177, %v178
      %v180 = vrot.slane %v179, 1
      %v181 = vadd.f32 %v179, %v180
      %s182 = vtos %v181
      %s183 = sadd.f32 %s172, %s182
      %s184 = scalar_lea.smem [#allocation8], 2
      %185 = sst [smem:[%s184]] %s183
      %s186 = sld [smem:[#allocation8 + $0x3]]
      %v187 = vsel %vm163, 1, 0
      %v188 = vcvt.s32.f32 %v187
      %v189 = vsel %vm61, %v188, 0.0
      %190 = vadd.xlane.f32.xlu0 %v189
      %v191 = vpop.xlane.xlu0 %190
      %v192 = vrot.slane %v191, 4
      %v193 = vadd.f32 %v191, %v192
      %v194 = vrot.slane %v193, 2
      %v195 = vadd.f32 %v193, %v194
      %v196 = vrot.slane %v195, 1
      %v197 = vadd.f32 %v195, %v196
      %s198 = vtos %v197
      %s199 = sadd.f32 %s186, %s198
      %s200 = scalar_lea.smem [#allocation8], 3
      %201 = sst [smem:[%s200]] %s199
    $region33: #{tpu_custom_call.1} parent=1 // pred_fallthru
      _
    // Predicated region
    $region34: #{tpu_custom_call.1} parent=1 // pred_check
      _
    $region35: #{tpu_custom_call.1} parent=1 // pred_check_branch
      %203 = sbr.rel (0) target = $region37
    $region36: #{tpu_custom_call.1} parent=1 // pred_region
      %s205 = ssub.s32 16, 16
      %206 = vsyncadd [#allocation9], %s205
      %209 = dma.smem_to_hbm [#allocation8], 16, %s4, [#allocation9]
    $region37: #{tpu_custom_call.1} parent=1 // pred_fallthru
      _
    // Predicated region
    $region38: #{tpu_custom_call.1} parent=1 // pred_check
      _
    $region39: #{tpu_custom_call.1} parent=1 // pred_check_branch
      %211 = sbr.rel (0) target = $region41
    $region40: #{tpu_custom_call.1} parent=1 // pred_region
      %212 = dma.done [#allocation9], 16
    $region41: #{tpu_custom_call.1} parent=1 // pred_fallthru
      _
    %213 = sfence
    %214 = vsyncpa [#allocation9], 1

</llo_original>
